<compile_context>
chip_gen: v5e
topology: v5e:2x2
jax: 0.10.0
libtpu: 0.0.40
codegen_flags: <defaults>
</compile_context>

<pallas_src>
import jax
import jax.numpy as jnp
from jax.experimental import pallas as pl
from jax.experimental.pallas import tpu as pltpu

_HIGHEST = jax.lax.Precision.HIGHEST


def _round_up(a, b):
    return (a + b - 1) // b * b


def me_kernel(pool_ref, w_ref, shift_ref, o_ref):
    # pool_ref:  (Cin_p, tile)  pooled activations, channels-on-sublane
    # w_ref:     (Cout_p, Cin_p) conv weight with BN scale pre-folded
    # shift_ref: (Cout_p, 1)     BN shift (beta - mean*scale)
    # One MXU matmul (tiny K, big lane-dense N) + per-channel broadcast add.
    y = jnp.dot(w_ref[...], pool_ref[...],
                preferred_element_type=jnp.float32, precision=_HIGHEST)
    o_ref[...] = y + shift_ref[...]


def _me_forward_impl(x, w_pw, gamma, beta, *, tile_rows=65536):
    """x: (N, Cin, H, W) f32; w_pw: (Cout, Cin, 1, 1); gamma/beta: (Cout,)."""
    n, cin, h, w = x.shape
    cout = w_pw.shape[0]
    ho = -(-h // 2)                      # ceil_mode=True
    wo = -(-w // 2)
    rows = n * ho * wo

    # ---- MaxPool2d(2, ceil_mode=True): -inf padding never wins -----------
    x_pad = jnp.pad(x, ((0, 0), (0, 0), (0, 2 * ho - h), (0, 2 * wo - w)),
                    constant_values=-jnp.inf)
    pooled = jnp.max(x_pad.reshape(n, cin, ho, 2, wo, 2), axis=(3, 5))

    # channels-on-sublane / rows-on-lane layout: (Cin, rows)
    pooled_cr = jnp.transpose(pooled, (1, 0, 2, 3)).reshape(cin, rows)
    pooled_cr = pooled_cr.astype(jnp.float32)

    # ---- BN batch statistics via conv linearity (XLA, single read pass) ---
    # y = W p  =>  mean_y = W mu_p ; var_y = diag(W Cov_p W^T) with Cov_p
    # from the mean-centered Gram (numerically stable, biased/N as BN uses).
    w_mat = w_pw[:, :, 0, 0].astype(jnp.float32)             # (Cout, Cin)
    mu_p = jnp.mean(pooled_cr, axis=1, keepdims=True)         # (Cin, 1)
    centered = pooled_cr - mu_p
    gram = jnp.dot(centered, centered.T, precision=_HIGHEST)  # (Cin, Cin)
    mean_y = jnp.dot(w_mat, mu_p, precision=_HIGHEST)[:, 0]   # (Cout,)
    var_y = jnp.sum(jnp.dot(w_mat, gram, precision=_HIGHEST) * w_mat,
                    axis=1) / rows                             # (Cout,)
    inv_std = jax.lax.rsqrt(var_y + 1e-5)
    scale = gamma.astype(jnp.float32) * inv_std                # (Cout,)
    shift = beta.astype(jnp.float32) - mean_y * scale          # (Cout,)
    w_folded = w_mat * scale[:, None]                          # (Cout, Cin)

    # ---- pad channels to sublane multiples (free: HBM tiling pads anyway) -
    cin_p = _round_up(cin, 8)
    cout_p = _round_up(cout, 8)
    pooled_cr = jnp.pad(pooled_cr, ((0, cin_p - cin), (0, 0)))
    w_folded = jnp.pad(w_folded, ((0, cout_p - cout), (0, cin_p - cin)))
    shift2 = jnp.pad(shift.reshape(cout, 1), ((0, cout_p - cout), (0, 0)))

    # ---- row tiling: biggest lane-dense tile under a v7x-safe VMEM budget -
    vmem_budget = 32 * 1024 * 1024             # double-buffered in+out blocks
    bytes_per_row = 2 * (cin_p + cout_p) * 4   # 2 buffers x (in + out) x f32
    max_tile_by_vmem = max(128, (vmem_budget // bytes_per_row) // 128 * 128)
    tile = min(_round_up(rows, 128), _round_up(tile_rows, 128),
               max_tile_by_vmem)
    rows_pad = _round_up(rows, tile)
    # Zero row-padding: padded output columns become exactly `shift` and are
    # sliced off below; statistics were computed on the unpadded data.
    pooled_cr = jnp.pad(pooled_cr, ((0, 0), (0, rows_pad - rows)))
    num_tiles = rows_pad // tile

    out2d = pl.pallas_call(
        me_kernel,
        out_shape=jax.ShapeDtypeStruct((cout_p, rows_pad), jnp.float32),
        grid_spec=pltpu.PrefetchScalarGridSpec(
            num_scalar_prefetch=0,
            grid=(num_tiles,),                               # row tiles only
            in_specs=[
                pl.BlockSpec((cin_p, tile), lambda t: (0, t)),    # pooled
                pl.BlockSpec((cout_p, cin_p), lambda t: (0, 0)),  # weight
                pl.BlockSpec((cout_p, 1), lambda t: (0, 0)),      # shift
            ],
            out_specs=pl.BlockSpec((cout_p, tile), lambda t: (0, t))),
        compiler_params=pltpu.CompilerParams(
            # No cross-tile state -> row axis is parallel (v7x megacore).
            dimension_semantics=("parallel",),
            vmem_limit_bytes=48 * 1024 * 1024),
    )(pooled_cr, w_folded, shift2)

    out = out2d[:cout, :rows].reshape(cout, n, ho, wo)
    return jnp.transpose(out, (1, 0, 2, 3))                  # back to NCHW


me_forward = jax.jit(_me_forward_impl, static_argnames=("tile_rows",))


def me_reference(x, w_pw, gamma, beta):
    """Plain-JAX reference mirroring the PyTorch forward (training-mode BN)."""
    n, cin, h, w = x.shape
    ho, wo = -(-h // 2), -(-w // 2)
    x_pad = jnp.pad(x, ((0, 0), (0, 0), (0, 2 * ho - h), (0, 2 * wo - w)),
                    constant_values=-jnp.inf)
    pooled = jnp.max(x_pad.reshape(n, cin, ho, 2, wo, 2), axis=(3, 5))
    y = jnp.einsum('nchw,oc->nohw', pooled, w_pw[:, :, 0, 0],
                   precision=_HIGHEST)
    mean = jnp.mean(y, axis=(0, 2, 3), keepdims=True)
    var = jnp.mean((y - mean) ** 2, axis=(0, 2, 3), keepdims=True)
    yn = (y - mean) / jnp.sqrt(var + 1e-5)
    return yn * gamma.reshape(1, -1, 1, 1) + beta.reshape(1, -1, 1, 1)


if __name__ == "__main__":
    key = jax.random.PRNGKey(0)
    k_x, k_w, k_g, k_b, k_x2 = jax.random.split(key, 5)

    # Primary test: ME1-shaped channels (Cin=3 -> Cout=12), even spatial.
    N, Cin, H, W = 2, 3, 16, 16
    Cout = 12
    x = jax.random.normal(k_x, (N, Cin, H, W), dtype=jnp.float32)
    w_pw = jax.random.normal(k_w, (Cout, Cin, 1, 1), dtype=jnp.float32) * 0.3
    gamma = jax.random.normal(k_g, (Cout,), dtype=jnp.float32) * 0.1 + 1.0
    beta = jax.random.normal(k_b, (Cout,), dtype=jnp.float32) * 0.1

    out = jax.block_until_ready(me_forward(x, w_pw, gamma, beta))
    ref = jax.block_until_ready(me_reference(x, w_pw, gamma, beta))
    assert out.shape == (N, Cout, H // 2, W // 2), out.shape
    err = float(jnp.max(jnp.abs(out - ref)))
    assert err < 1e-4, err

    # Secondary test: odd spatial size (ceil_mode path) + tiny tile_rows to
    # force a multi-tile parallel grid and exercise row padding.
    H2, W2 = 17, 23
    x2 = jax.random.normal(k_x2, (N, Cin, H2, W2), dtype=jnp.float32)
    out2 = jax.block_until_ready(
        me_forward(x2, w_pw, gamma, beta, tile_rows=128))
    ref2 = jax.block_until_ready(me_reference(x2, w_pw, gamma, beta))
    assert out2.shape == (N, Cout, (H2 + 1) // 2, (W2 + 1) // 2), out2.shape
    err2 = float(jnp.max(jnp.abs(out2 - ref2)))
    assert err2 < 1e-4, err2

    print("KERNEL_OK")
</pallas_src>

<mosaic_0001>
module attributes {stable_mosaic.version = 11 : i64} {
  func.func @me_kernel(%arg0: i32, %arg1: memref<8x128xf32, #tpu.memory_space<vmem>>, %arg2: memref<16x8xf32, #tpu.memory_space<vmem>>, %arg3: memref<16x1xf32, #tpu.memory_space<vmem>>, %arg4: memref<16x128xf32, #tpu.memory_space<vmem>>) attributes {dimension_semantics = [#tpu.dimension_semantics<parallel>], iteration_bounds = array<i64: 1>, scalar_prefetch = 0 : i64, scratch_operands = 0 : i64, tpu.core_type = #tpu.core_type<tc>, window_params = [{transform_indices = @transform_0, window_bounds = array<i64: 8, 128>}, {pipeline_mode = #tpu.pipeline_mode<synchronous>, transform_indices = @transform_1, window_bounds = array<i64: 16, 8>}, {pipeline_mode = #tpu.pipeline_mode<synchronous>, transform_indices = @transform_2, window_bounds = array<i64: 16, 1>}, {transform_indices = @transform_3, window_bounds = array<i64: 16, 128>}]} {
    %c0 = arith.constant 0 : index
    %c0_0 = arith.constant 0 : index
    %0 = vector.load %arg2[%c0, %c0_0] : memref<16x8xf32, #tpu.memory_space<vmem>>, vector<16x8xf32>
    %c0_1 = arith.constant 0 : index
    %c0_2 = arith.constant 0 : index
    %1 = vector.load %arg1[%c0_1, %c0_2] : memref<8x128xf32, #tpu.memory_space<vmem>>, vector<8x128xf32>
    %cst = arith.constant dense<0.000000e+00> : vector<16x128xf32>
    %2 = tpu.matmul %0, %1, %cst {dimension_numbers = #tpu.dot_dimension_numbers<[1], [0], [0], [1], [0, 0, 1, 1], [], []>, precision = #tpu.contract_precision<fp32>} : vector<16x8xf32>, vector<8x128xf32>, vector<16x128xf32> -> vector<16x128xf32>
    %c0_3 = arith.constant 0 : index
    %c0_4 = arith.constant 0 : index
    %3 = vector.load %arg3[%c0_3, %c0_4] : memref<16x1xf32, #tpu.memory_space<vmem>>, vector<16x1xf32>
    %4 = vector.broadcast %3 : vector<16x1xf32> to vector<16x128xf32>
    %5 = arith.addf %2, %4 : vector<16x128xf32>
    %c0_5 = arith.constant 0 : index
    %c0_6 = arith.constant 0 : index
    %6 = vector.load %arg4[%c0_5, %c0_6] : memref<16x128xf32, #tpu.memory_space<vmem>>, vector<16x128xf32>
    tpu.vector_store %arg4[%c0_5, %c0_6], %5 {strides = array<i32>} : memref<16x128xf32, #tpu.memory_space<vmem>>, vector<16x128xf32>,
    return
  }
  func.func @transform_0(%arg0: i32) -> (i32, i32) {
    %c0_i32 = arith.constant 0 : i32
    %c0_i32_0 = arith.constant 0 : i32
    return %c0_i32, %arg0 : i32, i32
  }
  func.func @transform_1(%arg0: i32) -> (i32, i32) {
    %c0_i32 = arith.constant 0 : i32
    %c0_i32_0 = arith.constant 0 : i32
    %c0_i32_1 = arith.constant 0 : i32
    return %c0_i32, %c0_i32_0 : i32, i32
  }
  func.func @transform_2(%arg0: i32) -> (i32, i32) {
    %c0_i32 = arith.constant 0 : i32
    %c0_i32_0 = arith.constant 0 : i32
    %c0_i32_1 = arith.constant 0 : i32
    return %c0_i32, %c0_i32_0 : i32, i32
  }
  func.func @transform_3(%arg0: i32) -> (i32, i32) {
    %c0_i32 = arith.constant 0 : i32
    %c0_i32_0 = arith.constant 0 : i32
    return %c0_i32, %arg0 : i32, i32
  }
}

</mosaic_0001>

<llo_original>
// kernel: _me_forward_impl.1
$region0: #{_me_forward_impl.1}
  #allocation0 [shape = 'u32[]', space=smem, size = 0x4, offset = 0x4, fixed_abs, tag = 'smem constant byte address 0x4 - core index']
  #allocation1 [shape = 'u32[72,128]{1,0:T(1,128)}', space=vmem, size = 0x9000, scoped, tag = 'internal scratch']
  %s0 = inlined_call_operand.vmem [shape: f32[8,128], index: 0, kind: input, shape index: {}]
  %s1 = inlined_call_operand.vmem [shape: f32[16,8], index: 1, kind: input, shape index: {}]
  %s2 = inlined_call_operand.vmem [shape: f32[16,1], index: 2, kind: input, shape index: {}]
  %s3 = inlined_call_operand.vmem [shape: f32[16,128], index: 3, kind: output, shape index: {}]
  %s4 = sld [smem:[#allocation0]]
  $region22: #{_me_forward_impl.1} parent=0
    _
  %s6 = ssub.s32 1, %s4
  %s7 = scalar_select 0, %s6, %s4
  // Predicated region
  $region2: #{_me_forward_impl.1} parent=0 // pred_check
    _
  $region3: #{_me_forward_impl.1} parent=0 // pred_check_branch
    %9 = sbr.rel (0) target = $region5
  $region4: #{_me_forward_impl.1} parent=0 // pred_region
    _
  $region5: #{_me_forward_impl.1} parent=0 // pred_fallthru
    _
  // Predicated region
  $region6: #{_me_forward_impl.1} parent=0 // pred_check
    _
  $region7: #{_me_forward_impl.1} parent=0 // pred_check_branch
    %11 = sbr.rel (0) target = $region9
  $region8: #{_me_forward_impl.1} parent=0 // pred_region
    _
  $region9: #{_me_forward_impl.1} parent=0 // pred_fallthru
    _
  // Predicated region
  $region10: #{_me_forward_impl.1} parent=0 // pred_check
    _
  $region11: #{_me_forward_impl.1} parent=0 // pred_check_branch
    %13 = sbr.rel (0) target = $region13
  $region12: #{_me_forward_impl.1} parent=0 // pred_region
    _
  $region13: #{_me_forward_impl.1} parent=0 // pred_fallthru
    _
  %v14 = vld [vmem:[%s1] sm:$0xff]
  %v15 = vld [vmem:[%s1 + $0x8] sm:$0xff]
  %v16 = vld [vmem:[%s0] sm:$0xff]
  %v17 = vld [vmem:[%s2] sm:$0xff]
  %v18 = vld [vmem:[%s2 + $0x8] sm:$0xff]
  %20 = vset.pattern.permute.xlu0 0
  %21 = vperm.xlu0 %20, %v17
  %v22 = vpop.permute.xlu0 %21
  %25 = vset.pattern.permute.xlu0 0
  %26 = vperm.xlu0 %25, %v18
  %v27 = vpop.permute.xlu0 %26
  %vm29 = vcmask 64512
  %v31 = vsel %vm29, %v14, 0
  %v34 = vsel %vm29, %v15, 0
  %36 = vmatpush.msra.mxu0 0.0
  %37 = vmatpush.msra.mxu0 0.0
  %38 = vmatpush.msra.mxu0 0.0
  %39 = vmatpush.msra.mxu0 0.0
  %40 = vmatpush.msra.mxu0 0.0
  %41 = vmatpush.msra.mxu0 0.0
  %42 = vmatpush.msra.mxu0 0.0
  %43 = vmatpush.msra.mxu0 0.0
  %44 = vmatpush.msra.mxu0 0.0
  %45 = vmatpush.msra.mxu0 0.0
  %46 = vmatpush.msra.mxu0 0.0
  %47 = vmatpush.msra.mxu0 0.0
  %48 = vmatpush.msra.mxu0 0.0
  %49 = vmatpush.msra.mxu0 0.0
  %50 = vmatpush.msra.mxu0 0.0
  %v51 = vand.u32 %v16, 4294901760
  %52 = vmatpush.msra.mxu0 %v51
  %v53 = vand.u32 %v31, 4294901760
  %v54 = vsub.f32 %v31, %v53
  %v55 = vand.u32 %v54, 4294901760
  %v56 = vsub.f32 %v54, %v55
  %v57 = vand.u32 %v56, 4294901760
  %58 = vmatmul.f32.gmra.mxu0 %v57
  %v59 = vpop.f32.mrf.mxu0
  %v60 = vadd.f32 %v22, %v59
  %v61 = vand.u32 %v34, 4294901760
  %v62 = vsub.f32 %v34, %v61
  %v63 = vand.u32 %v62, 4294901760
  %v64 = vsub.f32 %v62, %v63
  %v65 = vand.u32 %v64, 4294901760
  %66 = vmatmul.f32.gmra.mxu0 %v65
  %v67 = vpop.f32.mrf.mxu0
  %v68 = vadd.f32 %v27, %v67
  %69 = vdwg.mxu0
  %70 = vmatpush.msra.mxu0 0.0
  %71 = vmatpush.msra.mxu0 0.0
  %72 = vmatpush.msra.mxu0 0.0
  %73 = vmatpush.msra.mxu0 0.0
  %74 = vmatpush.msra.mxu0 0.0
  %75 = vmatpush.msra.mxu0 0.0
  %76 = vmatpush.msra.mxu0 0.0
  %77 = vmatpush.msra.mxu0 0.0
  %78 = vmatpush.msra.mxu0 0.0
  %79 = vmatpush.msra.mxu0 0.0
  %80 = vmatpush.msra.mxu0 0.0
  %81 = vmatpush.msra.mxu0 0.0
  %82 = vmatpush.msra.mxu0 0.0
  %83 = vmatpush.msra.mxu0 0.0
  %84 = vmatpush.msra.mxu0 0.0
  %v85 = vand.u32 %v16, 4294901760
  %v86 = vsub.f32 %v16, %v85
  %v87 = vand.u32 %v86, 4294901760
  %v88 = vsub.f32 %v86, %v87
  %v89 = vand.u32 %v88, 4294901760
  %90 = vmatpush.msra.mxu0 %v89
  %v91 = vand.u32 %v31, 4294901760
  %92 = vmatmul.f32.gmra.mxu0 %v91
  %v93 = vpop.f32.mrf.mxu0
  %v94 = vadd.f32 %v60, %v93
  %v95 = vand.u32 %v34, 4294901760
  %96 = vmatmul.f32.gmra.mxu0 %v95
  %v97 = vpop.f32.mrf.mxu0
  %v98 = vadd.f32 %v68, %v97
  %99 = vdwg.mxu0
  %100 = vmatpush.msra.mxu0 0.0
  %101 = vmatpush.msra.mxu0 0.0
  %102 = vmatpush.msra.mxu0 0.0
  %103 = vmatpush.msra.mxu0 0.0
  %104 = vmatpush.msra.mxu0 0.0
  %105 = vmatpush.msra.mxu0 0.0
  %106 = vmatpush.msra.mxu0 0.0
  %107 = vmatpush.msra.mxu0 0.0
  %108 = vmatpush.msra.mxu0 0.0
  %109 = vmatpush.msra.mxu0 0.0
  %110 = vmatpush.msra.mxu0 0.0
  %111 = vmatpush.msra.mxu0 0.0
  %112 = vmatpush.msra.mxu0 0.0
  %113 = vmatpush.msra.mxu0 0.0
  %114 = vmatpush.msra.mxu0 0.0
  %v115 = vand.u32 %v16, 4294901760
  %v116 = vsub.f32 %v16, %v115
  %117 = vmatpush.msra.mxu0 %v116
  %v118 = vand.u32 %v31, 4294901760
  %v119 = vsub.f32 %v31, %v118
  %120 = vmatmul.f32.gmra.mxu0 %v119
  %v121 = vpop.f32.mrf.mxu0
  %v122 = vadd.f32 %v94, %v121
  %v123 = vand.u32 %v34, 4294901760
  %v124 = vsub.f32 %v34, %v123
  %125 = vmatmul.f32.gmra.mxu0 %v124
  %v126 = vpop.f32.mrf.mxu0
  %v127 = vadd.f32 %v98, %v126
  %128 = vdwg.mxu0
  %129 = vmatpush.msra.mxu0 0.0
  %130 = vmatpush.msra.mxu0 0.0
  %131 = vmatpush.msra.mxu0 0.0
  %132 = vmatpush.msra.mxu0 0.0
  %133 = vmatpush.msra.mxu0 0.0
  %134 = vmatpush.msra.mxu0 0.0
  %135 = vmatpush.msra.mxu0 0.0
  %136 = vmatpush.msra.mxu0 0.0
  %137 = vmatpush.msra.mxu0 0.0
  %138 = vmatpush.msra.mxu0 0.0
  %139 = vmatpush.msra.mxu0 0.0
  %140 = vmatpush.msra.mxu0 0.0
  %141 = vmatpush.msra.mxu0 0.0
  %142 = vmatpush.msra.mxu0 0.0
  %143 = vmatpush.msra.mxu0 0.0
  %v144 = vand.u32 %v16, 4294901760
  %145 = vmatpush.msra.mxu0 %v144
  %v146 = vand.u32 %v31, 4294901760
  %v147 = vsub.f32 %v31, %v146
  %v148 = vand.u32 %v147, 4294901760
  %149 = vmatmul.f32.gmra.mxu0 %v148
  %v150 = vpop.f32.mrf.mxu0
  %v151 = vadd.f32 %v122, %v150
  %v152 = vand.u32 %v34, 4294901760
  %v153 = vsub.f32 %v34, %v152
  %v154 = vand.u32 %v153, 4294901760
  %155 = vmatmul.f32.gmra.mxu0 %v154
  %v156 = vpop.f32.mrf.mxu0
  %v157 = vadd.f32 %v127, %v156
  %158 = vdwg.mxu0
  %159 = vmatpush.msra.mxu0 0.0
  %160 = vmatpush.msra.mxu0 0.0
  %161 = vmatpush.msra.mxu0 0.0
  %162 = vmatpush.msra.mxu0 0.0
  %163 = vmatpush.msra.mxu0 0.0
  %164 = vmatpush.msra.mxu0 0.0
  %165 = vmatpush.msra.mxu0 0.0
  %166 = vmatpush.msra.mxu0 0.0
  %167 = vmatpush.msra.mxu0 0.0
  %168 = vmatpush.msra.mxu0 0.0
  %169 = vmatpush.msra.mxu0 0.0
  %170 = vmatpush.msra.mxu0 0.0
  %171 = vmatpush.msra.mxu0 0.0
  %172 = vmatpush.msra.mxu0 0.0
  %173 = vmatpush.msra.mxu0 0.0
  %v174 = vand.u32 %v16, 4294901760
  %v175 = vsub.f32 %v16, %v174
  %v176 = vand.u32 %v175, 4294901760
  %177 = vmatpush.msra.mxu0 %v176
  %v178 = vand.u32 %v31, 4294901760
  %179 = vmatmul.f32.gmra.mxu0 %v178
  %v180 = vpop.f32.mrf.mxu0
  %v181 = vadd.f32 %v151, %v180
  %v182 = vand.u32 %v34, 4294901760
  %183 = vmatmul.f32.gmra.mxu0 %v182
  %v184 = vpop.f32.mrf.mxu0
  %v185 = vadd.f32 %v157, %v184
  %186 = vdwg.mxu0
  %187 = vmatpush.msra.mxu0 0.0
  %188 = vmatpush.msra.mxu0 0.0
  %189 = vmatpush.msra.mxu0 0.0
  %190 = vmatpush.msra.mxu0 0.0
  %191 = vmatpush.msra.mxu0 0.0
  %192 = vmatpush.msra.mxu0 0.0
  %193 = vmatpush.msra.mxu0 0.0
  %194 = vmatpush.msra.mxu0 0.0
  %195 = vmatpush.msra.mxu0 0.0
  %196 = vmatpush.msra.mxu0 0.0
  %197 = vmatpush.msra.mxu0 0.0
  %198 = vmatpush.msra.mxu0 0.0
  %199 = vmatpush.msra.mxu0 0.0
  %200 = vmatpush.msra.mxu0 0.0
  %201 = vmatpush.msra.mxu0 0.0
  %v202 = vand.u32 %v16, 4294901760
  %203 = vmatpush.msra.mxu0 %v202
  %v204 = vand.u32 %v31, 4294901760
  %205 = vmatmul.f32.gmra.mxu0 %v204
  %v206 = vpop.f32.mrf.mxu0
  %v207 = vadd.f32 %v181, %v206
  %v208 = vand.u32 %v34, 4294901760
  %209 = vmatmul.f32.gmra.mxu0 %v208
  %v210 = vpop.f32.mrf.mxu0
  %v211 = vadd.f32 %v185, %v210
  %212 = vdwg.mxu0
  %213 = vst [vmem:[%s3] sm:$0xff] %v207
  %214 = vst [vmem:[%s3 + $0x8] sm:$0xff] %v211
  // Predicated region
  $region14: #{_me_forward_impl.1} parent=0 // pred_check
    _
  $region15: #{_me_forward_impl.1} parent=0 // pred_check_branch
    %216 = sbr.rel (0) target = $region17
  $region16: #{_me_forward_impl.1} parent=0 // pred_region
    _
  $region17: #{_me_forward_impl.1} parent=0 // pred_fallthru
    _
  // Predicated region
  $region18: #{_me_forward_impl.1} parent=0 // pred_check
    _
  $region19: #{_me_forward_impl.1} parent=0 // pred_check_branch
    %218 = sbr.rel (0) target = $region21
  $region20: #{_me_forward_impl.1} parent=0 // pred_region
    _
  $region21: #{_me_forward_impl.1} parent=0 // pred_fallthru
    _

</llo_original>
